<compile_context>
chip_gen: v6e
topology: v6e:2x2x1
jax: 0.10.0
libtpu: 0.0.40
codegen_flags: <defaults>
</compile_context>

<pallas_src>
import math

import jax
import jax.numpy as jnp
from jax.experimental import pallas as pl
from jax.experimental.pallas import tpu as pltpu


def _identity_kernel(x_ref, o_ref):
    # DummyLayerNorm.forward(x) -> x  (no normalization is performed)
    o_ref[...] = x_ref[...]


# ~2 MiB per block; input + output, each double-buffered (~4x live) => ~8 MiB
# of VMEM, safely under the default scoped limit on all generations without
# needing vmem_limit_bytes overrides.
_TARGET_BLOCK_BYTES = 2 * 1024 * 1024


def _sublane_pack(itemsize):
    # Rows per vreg for the dtype: f32 -> 8, bf16/f16 -> 16, int8/fp8 -> 32.
    return max(8, 32 // max(itemsize, 1))


def _pick_lane_width(total):
    # Largest convenient multiple of 128 that divides the element count.
    for cand in (8192, 4096, 2048, 1024, 512, 256, 128):
        if total % cand == 0:
            return cand
    return None


def _pick_tile_rows(rows, lane, itemsize):
    pack = _sublane_pack(itemsize)
    if rows <= pack:
        return rows  # full-extent first dim is always a legal block shape
    row_bytes = lane * itemsize
    t = max(pack, min(rows, _TARGET_BLOCK_BYTES // max(row_bytes, 1)))
    t = max(pack, (t // pack) * pack)
    # Prefer >= 2 grid steps so v7x's two TensorCores both get work.
    if pl.cdiv(rows, t) < 2:
        t = max(pack, (((rows + 1) // 2) // pack) * pack)
    return t


def dummy_layer_norm(x, normalized_shape=None, eps=1e-5, *, fast_path=False):
    """Pallas implementation of DummyLayerNorm: returns x unchanged.

    normalized_shape / eps are accepted for API parity but unused, exactly as
    in the PyTorch module (its __init__ stores nothing).  `fast_path=True`
    skips the kernel entirely (the truly optimal identity); the default runs
    the tiled Pallas copy so the kernel path is exercised.
    """
    if fast_path:
        return x

    orig_shape = x.shape
    total = math.prod(orig_shape) if orig_shape else 1
    itemsize = jnp.dtype(x.dtype).itemsize

    # Lane-dense reshape: make the last (lane) dim a big multiple of 128.
    lane = _pick_lane_width(total)
    if lane is None:
        # Fallback: keep the original trailing dim as the lane dim
        # (full-extent last dim is always a legal block shape).
        lane = orig_shape[-1] if orig_shape else 1
    lane = max(lane, 1)
    rows = total // lane
    x2d = x.reshape(rows, lane)

    tile_rows = _pick_tile_rows(rows, lane, itemsize)
    grid = (pl.cdiv(rows, tile_rows),)

    out2d = pl.pallas_call(
        _identity_kernel,
        out_shape=jax.ShapeDtypeStruct((rows, lane), x.dtype),
        grid=grid,
        in_specs=[pl.BlockSpec((tile_rows, lane), lambda i: (i, 0))],
        out_specs=pl.BlockSpec((tile_rows, lane), lambda i: (i, 0)),
        input_output_aliases={0: 0},
        compiler_params=pltpu.CompilerParams(
            dimension_semantics=("parallel",)
        ),
    )(x2d)

    return out2d.reshape(orig_shape)


if __name__ == "__main__":
    # Small LLM-block-shaped input: (batch=2, seq=8, hidden=32)
    key = jax.random.PRNGKey(0)
    x = jax.random.normal(key, (2, 8, 32), dtype=jnp.float32)

    # DummyLayerNorm has no parameters, so there is nothing to initialize.
    y = dummy_layer_norm(x, normalized_shape=32, eps=1e-5)
    jax.block_until_ready(y)

    assert y.shape == x.shape
    assert y.dtype == x.dtype
    assert bool(jnp.all(y == x))  # identity semantics, exact

    # Fast path (the recommended production path for a pure identity).
    y_fast = dummy_layer_norm(x, normalized_shape=32, eps=1e-5, fast_path=True)
    jax.block_until_ready(y_fast)
    assert bool(jnp.all(y_fast == x))

    # Larger, tiling-exercising shape (multiple grid steps, multiple of 128).
    x_big = jax.random.normal(key, (4, 256, 512), dtype=jnp.bfloat16)
    y_big = dummy_layer_norm(x_big, normalized_shape=512, eps=1e-5)
    jax.block_until_ready(y_big)
    assert y_big.shape == x_big.shape and y_big.dtype == x_big.dtype
    assert bool(jnp.all(y_big == x_big))

    print("KERNEL_OK")
</pallas_src>

<mosaic_0001>
module attributes {stable_mosaic.version = 11 : i64} {
  func.func @_identity_kernel(%arg0: i32, %arg1: memref<1x512xf32, #tpu.memory_space<vmem>>, %arg2: memref<1x512xf32, #tpu.memory_space<vmem>>) attributes {dimension_semantics = [#tpu.dimension_semantics<parallel>], iteration_bounds = array<i64: 1>, scalar_prefetch = 0 : i64, scratch_operands = 0 : i64, tpu.core_type = #tpu.core_type<tc>, window_params = [{transform_indices = @transform_0, window_bounds = array<i64: 1, 512>}, {transform_indices = @transform_1, window_bounds = array<i64: 1, 512>}]} {
    %c0 = arith.constant 0 : index
    %c0_0 = arith.constant 0 : index
    %0 = vector.load %arg1[%c0, %c0_0] : memref<1x512xf32, #tpu.memory_space<vmem>>, vector<1x512xf32>
    %c0_1 = arith.constant 0 : index
    %c0_2 = arith.constant 0 : index
    %1 = vector.load %arg2[%c0_1, %c0_2] : memref<1x512xf32, #tpu.memory_space<vmem>>, vector<1x512xf32>
    tpu.vector_store %arg2[%c0_1, %c0_2], %0 {strides = array<i32>} : memref<1x512xf32, #tpu.memory_space<vmem>>, vector<1x512xf32>,
    return
  }
  func.func @transform_0(%arg0: i32) -> (i32, i32) {
    %c0_i32 = arith.constant 0 : i32
    %c0_i32_0 = arith.constant 0 : i32
    return %arg0, %c0_i32 : i32, i32
  }
  func.func @transform_1(%arg0: i32) -> (i32, i32) {
    %c0_i32 = arith.constant 0 : i32
    %c0_i32_0 = arith.constant 0 : i32
    return %arg0, %c0_i32 : i32, i32
  }
}

</mosaic_0001>

<llo_original>
// kernel: tpu_custom_call.1
$region0: #{tpu_custom_call.1}
  #allocation0 [shape = 'u32[]', space=smem, size = 0x4, offset = 0x4, fixed_abs, tag = 'smem constant byte address 0x4 - core index']
  #allocation1 [shape = 'u32[144,128]{1,0:T(1,128)}', space=vmem, size = 0x12000, scoped, tag = 'internal scratch']
  %s0 = inlined_call_operand.hbm [shape: f32[1,512], index: 0, kind: input, shape index: {}, may-alias: {0,1}]
  %s1 = inlined_call_operand.hbm [shape: f32[1,512], index: 1, kind: output, shape index: {}, may-alias: {0,1}]
  %s2 = sld [smem:[#allocation0]]
  $region18: #{tpu_custom_call.1} parent=0
    _
  %s4 = ssub.s32 1, %s2
  %s5 = scalar_select 0, %s4, %s2
  $region1: #{tpu_custom_call.1} parent=0
    #allocation2 [shape = 'u8[2048]{0}', space=vmem, size = 0x800, scoped, tag = 'input window, operand 0, single buffered']
    #allocation3 [shape = 's32[1]{0}', space=sflag, size = 0x4, scoped, tag = 'scoped memory for tpu_custom_call.1']
    #allocation4 [shape = 's32[1]{0}', space=sflag, size = 0x4, scoped, tag = 'scoped memory for tpu_custom_call.1']
    #allocation5 [shape = 'u8[2048]{0}', space=vmem, size = 0x800, scoped, tag = 'output window, operand 0, single buffered']
    %6 = vsyncpa [#allocation3], 0
    %7 = vsyncpa [#allocation4], 0
    // Predicated region
    $region2: #{tpu_custom_call.1} parent=1 // pred_check
      _
    $region3: #{tpu_custom_call.1} parent=1 // pred_check_branch
      %9 = sbr.rel (0) target = $region5
    $region4: #{tpu_custom_call.1} parent=1 // pred_region
      %s11 = ssub.s32 64, 64
      %12 = vsyncadd [#allocation3], %s11
      %s14 = sshll.u32 [#allocation2], 4
      %s15 = int_to_ptr.vmem [resolvable:$true] %s14
      %17 = dma.hbm_to_vmem [thread:$0]  %s0, 64, %s15, [#allocation3]
    $region5: #{tpu_custom_call.1} parent=1 // pred_fallthru
      _
    // Predicated region
    $region6: #{tpu_custom_call.1} parent=1 // pred_check
      _
    $region7: #{tpu_custom_call.1} parent=1 // pred_check_branch
      %19 = sbr.rel (0) target = $region9
    $region8: #{tpu_custom_call.1} parent=1 // pred_region
      %20 = dma.done [#allocation3], 64
    $region9: #{tpu_custom_call.1} parent=1 // pred_fallthru
      _
    %v21 = vld [vmem:[#allocation2] sm:$0xf]
    %v22 = vlaneseq
    %vm23 = vcmp.ge.s32.totalorder %v22, 0
    %vm24 = vcmp.lt.s32.totalorder %v22, 512
    %vm25 = vmand %vm23, %vm24
    %26 = vst.msk [vmem:[#allocation5] sm:$0xf] %vm25, %v21
    // Predicated region
    $region10: #{tpu_custom_call.1} parent=1 // pred_check
      _
    $region11: #{tpu_custom_call.1} parent=1 // pred_check_branch
      %28 = sbr.rel (0) target = $region13
    $region12: #{tpu_custom_call.1} parent=1 // pred_region
      %s30 = ssub.s32 64, 64
      %31 = vsyncadd [#allocation4], %s30
      %s33 = sshll.u32 [#allocation5], 4
      %s34 = int_to_ptr.vmem [resolvable:$true] %s33
      %36 = dma.vmem_to_hbm [thread:$0]  %s34, 64, %s1, [#allocation4]
    $region13: #{tpu_custom_call.1} parent=1 // pred_fallthru
      _
    // Predicated region
    $region14: #{tpu_custom_call.1} parent=1 // pred_check
      _
    $region15: #{tpu_custom_call.1} parent=1 // pred_check_branch
      %38 = sbr.rel (0) target = $region17
    $region16: #{tpu_custom_call.1} parent=1 // pred_region
      %39 = dma.done [#allocation4], 64
    $region17: #{tpu_custom_call.1} parent=1 // pred_fallthru
      _
    %40 = vsyncpa [#allocation3], 1
    %41 = vsyncpa [#allocation4], 1

</llo_original>
